<compile_context>
chip_gen: v7x
topology: tpu7x:2x2x1
jax: 0.10.0
libtpu: 0.0.40
codegen_flags: <defaults>
</compile_context>

<pallas_src>
import functools

import jax
import jax.numpy as jnp
from jax import lax
from jax.experimental import pallas as pl
from jax.experimental.pallas import tpu as pltpu


def _vmem_limit_bytes() -> int:
    """~half of physical VMEM: 64 MiB on 128 MiB parts (v5e/v6e), 32 MiB on v7x."""
    try:
        cap = int(pltpu.get_tpu_info().vmem_capacity_bytes)
    except Exception:
        cap = 64 * 1024 * 1024
    return max(32 * 1024 * 1024, min(cap // 2, 64 * 1024 * 1024))


_VMEM_LIMIT = _vmem_limit_bytes()


def _pick_tile(dim: int, target: int, align: int) -> int:
    """Largest tile <= target that divides `dim` and is a multiple of `align`.
    Falls back to the full dim (always a legal block shape); note: for pathological
    (prime, huge) dims this fallback can inflate the per-block VMEM footprint."""
    if dim <= target:
        return dim
    t = (target // align) * align
    while t >= align:
        if dim % t == 0:
            return t
        t -= align
    return dim


# ---------------------------------------------------------------------------
# Kernel 1: fused qkv projection  (x @ Wq, x @ Wk, x @ Wv), bias-free, tiled
#           bf16 operands in, f32 accumulation, bf16 out
# ---------------------------------------------------------------------------
def _qkv_kernel(x_ref, wq_ref, wk_ref, wv_ref, q_ref, k_ref, v_ref,
                acc_q, acc_k, acc_v):
    @pl.when(pl.program_id(2) == 0)
    def _init():
        acc_q[...] = jnp.zeros_like(acc_q)
        acc_k[...] = jnp.zeros_like(acc_k)
        acc_v[...] = jnp.zeros_like(acc_v)

    xb = x_ref[...]  # bf16, cast once at the wrapper level
    acc_q[...] += jnp.dot(xb, wq_ref[...], preferred_element_type=jnp.float32)
    acc_k[...] += jnp.dot(xb, wk_ref[...], preferred_element_type=jnp.float32)
    acc_v[...] += jnp.dot(xb, wv_ref[...], preferred_element_type=jnp.float32)

    @pl.when(pl.program_id(2) == pl.num_programs(2) - 1)
    def _store():
        q_ref[...] = acc_q[...].astype(q_ref.dtype)
        k_ref[...] = acc_k[...].astype(k_ref.dtype)
        v_ref[...] = acc_v[...].astype(v_ref.dtype)


def qkv_projection(x2d, wq, wk, wv, *, tm=512, tn=256, tk=512):
    """x2d: (M, K) bf16; wq/wk/wv: (K, C) bf16 -> q, k, v each (M, C) bf16."""
    M, K = x2d.shape
    _, C = wq.shape
    tm = _pick_tile(M, tm, 8)
    tn = _pick_tile(C, tn, 128)
    tk = _pick_tile(K, tk, 128)
    grid = (M // tm, C // tn, K // tk)

    x_spec = pl.BlockSpec((tm, tk), lambda i, j, k: (i, k))
    w_spec = pl.BlockSpec((tk, tn), lambda i, j, k: (k, j))
    o_spec = pl.BlockSpec((tm, tn), lambda i, j, k: (i, j))
    out = jax.ShapeDtypeStruct((M, C), jnp.bfloat16)

    return pl.pallas_call(
        _qkv_kernel,
        out_shape=(out, out, out),
        grid=grid,
        in_specs=[x_spec, w_spec, w_spec, w_spec],
        out_specs=(o_spec, o_spec, o_spec),
        scratch_shapes=[pltpu.VMEM((tm, tn), jnp.float32),
                        pltpu.VMEM((tm, tn), jnp.float32),
                        pltpu.VMEM((tm, tn), jnp.float32)],
        compiler_params=pltpu.CompilerParams(
            dimension_semantics=("parallel", "parallel", "arbitrary"),
            vmem_limit_bytes=_VMEM_LIMIT),
    )(x2d, wq, wk, wv)


# ---------------------------------------------------------------------------
# Kernel 2: tiled linear with bias (output projection), bf16 in, f32 out
# ---------------------------------------------------------------------------
def _linear_bias_kernel(x_ref, w_ref, b_ref, o_ref, acc_ref):
    @pl.when(pl.program_id(2) == 0)
    def _init():
        acc_ref[...] = jnp.zeros_like(acc_ref)

    acc_ref[...] += jnp.dot(x_ref[...], w_ref[...],
                            preferred_element_type=jnp.float32)

    @pl.when(pl.program_id(2) == pl.num_programs(2) - 1)
    def _store():
        o_ref[...] = (acc_ref[...] + b_ref[...]).astype(o_ref.dtype)


def linear_bias(x2d, w, b, *, tm=512, tn=256, tk=512):
    """x2d: (M, K) bf16; w: (K, Nout) bf16; b: (1, Nout) f32 -> (M, Nout) f32."""
    M, K = x2d.shape
    _, Nout = w.shape
    tm = _pick_tile(M, tm, 8)
    tn = _pick_tile(Nout, tn, 128)
    tk = _pick_tile(K, tk, 128)
    grid = (M // tm, Nout // tn, K // tk)

    return pl.pallas_call(
        _linear_bias_kernel,
        out_shape=jax.ShapeDtypeStruct((M, Nout), jnp.float32),
        grid=grid,
        in_specs=[pl.BlockSpec((tm, tk), lambda i, j, k: (i, k)),
                  pl.BlockSpec((tk, tn), lambda i, j, k: (k, j)),
                  pl.BlockSpec((1, tn), lambda i, j, k: (0, j))],
        out_specs=pl.BlockSpec((tm, tn), lambda i, j, k: (i, j)),
        scratch_shapes=[pltpu.VMEM((tm, tn), jnp.float32)],
        compiler_params=pltpu.CompilerParams(
            dimension_semantics=("parallel", "parallel", "arbitrary"),
            vmem_limit_bytes=_VMEM_LIMIT),
    )(x2d, w, b)


# ---------------------------------------------------------------------------
# Kernel 3: flash-style multi-head attention core on (B, N, C) layout
#           (heads sliced on the lane axis, online softmax over a KV grid axis)
# ---------------------------------------------------------------------------
def _flash_attn_kernel(q_ref, k_ref, v_ref, o_ref, m_sc, l_sc, acc_sc, *, num_heads):
    C = q_ref.shape[-1]
    dh = C // num_heads
    j = pl.program_id(2)

    @pl.when(j == 0)
    def _init():
        m_sc[...] = jnp.full_like(m_sc, -jnp.inf)
        l_sc[...] = jnp.zeros_like(l_sc)
        acc_sc[...] = jnp.zeros_like(acc_sc)

    q = q_ref[0]    # (tq, C)  bf16, softmax scale already folded into Wq
    kk = k_ref[0]   # (tkv, C) bf16
    vv = v_ref[0]   # (tkv, C) bf16

    # Per-head 2D dots; every iteration's values are written back to scratch refs,
    # so vreg live ranges stay bounded (no list / concat).
    for h in range(num_heads):
        sl = slice(h * dh, (h + 1) * dh)
        # q_h @ k_h^T via dot_general on last dims (no k.T materialization).
        s = lax.dot_general(q[:, sl], kk[:, sl], (((1,), (1,)), ((), ())),
                            preferred_element_type=jnp.float32)        # (tq, tkv) f32
        m_old = m_sc[h]                                                 # (tq, 1)
        m_new = jnp.maximum(m_old, jnp.max(s, axis=-1, keepdims=True))
        alpha = jnp.exp(m_old - m_new)
        p = jnp.exp(s - m_new)                                          # unnormalized
        l_sc[h] = alpha * l_sc[h] + jnp.sum(p, axis=-1, keepdims=True)
        acc_sc[h] = alpha * acc_sc[h] + jnp.dot(p.astype(jnp.bfloat16), vv[:, sl],
                                                preferred_element_type=jnp.float32)
        m_sc[h] = m_new

    @pl.when(j == pl.num_programs(2) - 1)
    def _finalize():
        # Deferred normalization: touches tq*dh per head (not tq*N); single pass of
        # head-column stores into the lane-dense (tq, C) output tile.
        for h in range(num_heads):
            sl = slice(h * dh, (h + 1) * dh)
            o_ref[0, :, sl] = (acc_sc[h] * pl.reciprocal(l_sc[h], approx=True)
                               ).astype(o_ref.dtype)


def attention_core(q, k, v, num_heads, *, tq=256, tkv=256):
    """q, k, v: (B, N, C) bf16 (scale folded into q) -> (B, N, C) bf16."""
    B, N, C = q.shape
    dh = C // num_heads
    tq = _pick_tile(N, tq, 8)
    tkv = _pick_tile(N, tkv, 8)
    grid = (B, N // tq, N // tkv)

    q_spec = pl.BlockSpec((1, tq, C), lambda b, i, j: (b, i, 0))
    kv_spec = pl.BlockSpec((1, tkv, C), lambda b, i, j: (b, j, 0))

    return pl.pallas_call(
        functools.partial(_flash_attn_kernel, num_heads=num_heads),
        out_shape=jax.ShapeDtypeStruct((B, N, C), jnp.bfloat16),
        grid=grid,
        in_specs=[q_spec, kv_spec, kv_spec],
        out_specs=q_spec,
        scratch_shapes=[pltpu.VMEM((num_heads, tq, 1), jnp.float32),   # m (running max)
                        pltpu.VMEM((num_heads, tq, 1), jnp.float32),   # l (running sum)
                        pltpu.VMEM((num_heads, tq, dh), jnp.float32)], # acc
        compiler_params=pltpu.CompilerParams(
            dimension_semantics=("parallel", "parallel", "arbitrary"),
            vmem_limit_bytes=_VMEM_LIMIT),
    )(q, k, v)


# ---------------------------------------------------------------------------
# Full DeAttention forward
# ---------------------------------------------------------------------------
def de_attention(x, qkv_w, proj_w, proj_b, num_heads):
    """x: (B, N, C) f32; qkv_w: (3C, C) torch (out, in); proj_w: (C, C); proj_b: (C,)."""
    B, N, C = x.shape
    dh = C // num_heads
    scale = float(dh) ** -0.5

    # One-off weight prep: torch stores (out, in) -> kernels want (in, out);
    # fold the softmax scale into Wq; cast everything that feeds the MXU to bf16.
    wq = (qkv_w[0 * C:1 * C, :].T * scale).astype(jnp.bfloat16)
    wk = qkv_w[1 * C:2 * C, :].T.astype(jnp.bfloat16)
    wv = qkv_w[2 * C:3 * C, :].T.astype(jnp.bfloat16)
    wp = proj_w.T.astype(jnp.bfloat16)
    bp = proj_b.reshape(1, C).astype(jnp.float32)

    x2d = x.reshape(B * N, C).astype(jnp.bfloat16)

    # qkv_bias=False -> bias-free projection; q/k/v come out directly in (B, N, C)
    # layout (bf16) so no activation transposes / extra HBM round trips are needed.
    q, k, v = qkv_projection(x2d, wq, wk, wv)
    q = q.reshape(B, N, C)
    k = k.reshape(B, N, C)
    v = v.reshape(B, N, C)

    o = attention_core(q, k, v, num_heads)                # (B, N, C) bf16
    y = linear_bias(o.reshape(B * N, C), wp, bp)          # (B*N, C) f32
    return y.reshape(B, N, C)


# ---------------------------------------------------------------------------
# Pure-JAX reference for correctness check
# ---------------------------------------------------------------------------
def de_attention_ref(x, qkv_w, proj_w, proj_b, num_heads):
    B, N, C = x.shape
    dh = C // num_heads
    scale = float(dh) ** -0.5
    qkv = x @ qkv_w.T
    qkv = qkv.reshape(B, N, 3, num_heads, dh).transpose(2, 0, 3, 1, 4)
    q, k, v = qkv[0], qkv[1], qkv[2]
    attn = jnp.einsum("bhqd,bhkd->bhqk", q, k) * scale
    attn = jax.nn.softmax(attn, axis=-1)
    o = jnp.einsum("bhqk,bhkd->bhqd", attn, v)
    o = o.transpose(0, 2, 1, 3).reshape(B, N, C)
    return o @ proj_w.T + proj_b


if __name__ == "__main__":
    B, N, C, H = 2, 8, 64, 8  # head_dim = 8

    key = jax.random.PRNGKey(0)
    kx, kqkv, kpw, kpb = jax.random.split(key, 4)

    x = jax.random.normal(kx, (B, N, C), dtype=jnp.float32)
    qkv_w = 0.02 * jax.random.normal(kqkv, (3 * C, C), dtype=jnp.float32)  # (out, in)
    proj_w = 0.02 * jax.random.normal(kpw, (C, C), dtype=jnp.float32)      # (out, in)
    proj_b = 0.02 * jax.random.normal(kpb, (C,), dtype=jnp.float32)

    y = de_attention(x, qkv_w, proj_w, proj_b, H)
    y = jax.block_until_ready(y)

    y_ref = de_attention_ref(x, qkv_w, proj_w, proj_b, H)
    assert y.shape == (B, N, C)
    # bf16 MXU operands / bf16 inter-kernel activations (f32 accumulation) + approx
    # reciprocal -> loosened tolerance.
    max_err = float(jnp.max(jnp.abs(y - y_ref)))
    assert jnp.allclose(y, y_ref, atol=2e-2, rtol=2e-2), \
        f"mismatch vs reference (max abs err {max_err})"

    print("KERNEL_OK")
</pallas_src>

<mosaic_0001>
module attributes {stable_mosaic.version = 11 : i64} {
  func.func @_qkv_kernel(%arg0: i32, %arg1: i32, %arg2: i32, %arg3: memref<16x64xbf16, #tpu.memory_space<vmem>>, %arg4: memref<64x64xbf16, #tpu.memory_space<vmem>>, %arg5: memref<64x64xbf16, #tpu.memory_space<vmem>>, %arg6: memref<64x64xbf16, #tpu.memory_space<vmem>>, %arg7: memref<16x64xbf16, #tpu.memory_space<vmem>>, %arg8: memref<16x64xbf16, #tpu.memory_space<vmem>>, %arg9: memref<16x64xbf16, #tpu.memory_space<vmem>>, %arg10: memref<16x64xf32, #tpu.memory_space<vmem>>, %arg11: memref<16x64xf32, #tpu.memory_space<vmem>>, %arg12: memref<16x64xf32, #tpu.memory_space<vmem>>) attributes {dimension_semantics = [#tpu.dimension_semantics<parallel>, #tpu.dimension_semantics<parallel>, #tpu.dimension_semantics<arbitrary>], iteration_bounds = array<i64: 1, 1, 1>, scalar_prefetch = 0 : i64, scratch_operands = 3 : i64, tpu.core_type = #tpu.core_type<tc>, window_params = [{transform_indices = @transform_0, window_bounds = array<i64: 16, 64>}, {transform_indices = @transform_1, window_bounds = array<i64: 64, 64>}, {transform_indices = @transform_2, window_bounds = array<i64: 64, 64>}, {transform_indices = @transform_3, window_bounds = array<i64: 64, 64>}, {transform_indices = @transform_4, window_bounds = array<i64: 16, 64>}, {transform_indices = @transform_5, window_bounds = array<i64: 16, 64>}, {transform_indices = @transform_6, window_bounds = array<i64: 16, 64>}]} {
    %c0_i32 = arith.constant 0 : i32
    %0 = arith.cmpi eq, %arg2, %c0_i32 : i32
    %1 = arith.extui %0 : i1 to i32
    %c0_i32_0 = arith.constant 0 : i32
    %2 = arith.cmpi ne, %1, %c0_i32_0 : i32
    scf.if %2 {
      %cst_24 = arith.constant 0.000000e+00 : f32
      %22 = vector.broadcast %cst_24 : f32 to vector<16x64xf32>
      %c0_25 = arith.constant 0 : index
      %c0_26 = arith.constant 0 : index
      %23 = vector.load %arg10[%c0_25, %c0_26] : memref<16x64xf32, #tpu.memory_space<vmem>>, vector<16x64xf32>
      tpu.vector_store %arg10[%c0_25, %c0_26], %22 {strides = array<i32>} : memref<16x64xf32, #tpu.memory_space<vmem>>, vector<16x64xf32>,
      %cst_27 = arith.constant 0.000000e+00 : f32
      %24 = vector.broadcast %cst_27 : f32 to vector<16x64xf32>
      %c0_28 = arith.constant 0 : index
      %c0_29 = arith.constant 0 : index
      %25 = vector.load %arg11[%c0_28, %c0_29] : memref<16x64xf32, #tpu.memory_space<vmem>>, vector<16x64xf32>
      tpu.vector_store %arg11[%c0_28, %c0_29], %24 {strides = array<i32>} : memref<16x64xf32, #tpu.memory_space<vmem>>, vector<16x64xf32>,
      %cst_30 = arith.constant 0.000000e+00 : f32
      %26 = vector.broadcast %cst_30 : f32 to vector<16x64xf32>
      %c0_31 = arith.constant 0 : index
      %c0_32 = arith.constant 0 : index
      %27 = vector.load %arg12[%c0_31, %c0_32] : memref<16x64xf32, #tpu.memory_space<vmem>>, vector<16x64xf32>
      tpu.vector_store %arg12[%c0_31, %c0_32], %26 {strides = array<i32>} : memref<16x64xf32, #tpu.memory_space<vmem>>, vector<16x64xf32>,
    } else {
    }
    %c0 = arith.constant 0 : index
    %c0_1 = arith.constant 0 : index
    %3 = vector.load %arg3[%c0, %c0_1] : memref<16x64xbf16, #tpu.memory_space<vmem>>, vector<16x64xbf16>
    %c0_2 = arith.constant 0 : index
    %c0_3 = arith.constant 0 : index
    %4 = vector.load %arg10[%c0_2, %c0_3] : memref<16x64xf32, #tpu.memory_space<vmem>>, vector<16x64xf32>
    %c0_4 = arith.constant 0 : index
    %c0_5 = arith.constant 0 : index
    %5 = vector.load %arg4[%c0_4, %c0_5] : memref<64x64xbf16, #tpu.memory_space<vmem>>, vector<64x64xbf16>
    %cst = arith.constant dense<0.000000e+00> : vector<16x64xf32>
    %6 = tpu.matmul %3, %5, %cst {dimension_numbers = #tpu.dot_dimension_numbers<[1], [0], [0], [1], [0, 0, 1, 1], [], []>} : vector<16x64xbf16>, vector<64x64xbf16>, vector<16x64xf32> -> vector<16x64xf32>
    %7 = arith.addf %4, %6 : vector<16x64xf32>
    %c0_6 = arith.constant 0 : index
    %c0_7 = arith.constant 0 : index
    %8 = vector.load %arg10[%c0_6, %c0_7] : memref<16x64xf32, #tpu.memory_space<vmem>>, vector<16x64xf32>
    tpu.vector_store %arg10[%c0_6, %c0_7], %7 {strides = array<i32>} : memref<16x64xf32, #tpu.memory_space<vmem>>, vector<16x64xf32>,
    %c0_8 = arith.constant 0 : index
    %c0_9 = arith.constant 0 : index
    %9 = vector.load %arg11[%c0_8, %c0_9] : memref<16x64xf32, #tpu.memory_space<vmem>>, vector<16x64xf32>
    %c0_10 = arith.constant 0 : index
    %c0_11 = arith.constant 0 : index
    %10 = vector.load %arg5[%c0_10, %c0_11] : memref<64x64xbf16, #tpu.memory_space<vmem>>, vector<64x64xbf16>
    %cst_12 = arith.constant dense<0.000000e+00> : vector<16x64xf32>
    %11 = tpu.matmul %3, %10, %cst_12 {dimension_numbers = #tpu.dot_dimension_numbers<[1], [0], [0], [1], [0, 0, 1, 1], [], []>} : vector<16x64xbf16>, vector<64x64xbf16>, vector<16x64xf32> -> vector<16x64xf32>
    %12 = arith.addf %9, %11 : vector<16x64xf32>
    %c0_13 = arith.constant 0 : index
    %c0_14 = arith.constant 0 : index
    %13 = vector.load %arg11[%c0_13, %c0_14] : memref<16x64xf32, #tpu.memory_space<vmem>>, vector<16x64xf32>
    tpu.vector_store %arg11[%c0_13, %c0_14], %12 {strides = array<i32>} : memref<16x64xf32, #tpu.memory_space<vmem>>, vector<16x64xf32>,
    %c0_15 = arith.constant 0 : index
    %c0_16 = arith.constant 0 : index
    %14 = vector.load %arg12[%c0_15, %c0_16] : memref<16x64xf32, #tpu.memory_space<vmem>>, vector<16x64xf32>
    %c0_17 = arith.constant 0 : index
    %c0_18 = arith.constant 0 : index
    %15 = vector.load %arg6[%c0_17, %c0_18] : memref<64x64xbf16, #tpu.memory_space<vmem>>, vector<64x64xbf16>
    %cst_19 = arith.constant dense<0.000000e+00> : vector<16x64xf32>
    %16 = tpu.matmul %3, %15, %cst_19 {dimension_numbers = #tpu.dot_dimension_numbers<[1], [0], [0], [1], [0, 0, 1, 1], [], []>} : vector<16x64xbf16>, vector<64x64xbf16>, vector<16x64xf32> -> vector<16x64xf32>
    %17 = arith.addf %14, %16 : vector<16x64xf32>
    %c0_20 = arith.constant 0 : index
    %c0_21 = arith.constant 0 : index
    %18 = vector.load %arg12[%c0_20, %c0_21] : memref<16x64xf32, #tpu.memory_space<vmem>>, vector<16x64xf32>
    tpu.vector_store %arg12[%c0_20, %c0_21], %17 {strides = array<i32>} : memref<16x64xf32, #tpu.memory_space<vmem>>, vector<16x64xf32>,
    %c0_i32_22 = arith.constant 0 : i32
    %19 = arith.cmpi eq, %arg2, %c0_i32_22 : i32
    %20 = arith.extui %19 : i1 to i32
    %c0_i32_23 = arith.constant 0 : i32
    %21 = arith.cmpi ne, %20, %c0_i32_23 : i32
    scf.if %21 {
      %c0_24 = arith.constant 0 : index
      %c0_25 = arith.constant 0 : index
      %22 = vector.load %arg10[%c0_24, %c0_25] : memref<16x64xf32, #tpu.memory_space<vmem>>, vector<16x64xf32>
      %23 = arith.truncf %22 : vector<16x64xf32> to vector<16x64xbf16>
      %c0_26 = arith.constant 0 : index
      %c0_27 = arith.constant 0 : index
      %24 = vector.load %arg7[%c0_26, %c0_27] : memref<16x64xbf16, #tpu.memory_space<vmem>>, vector<16x64xbf16>
      tpu.vector_store %arg7[%c0_26, %c0_27], %23 {strides = array<i32>} : memref<16x64xbf16, #tpu.memory_space<vmem>>, vector<16x64xbf16>,
      %c0_28 = arith.constant 0 : index
      %c0_29 = arith.constant 0 : index
      %25 = vector.load %arg11[%c0_28, %c0_29] : memref<16x64xf32, #tpu.memory_space<vmem>>, vector<16x64xf32>
      %26 = arith.truncf %25 : vector<16x64xf32> to vector<16x64xbf16>
      %c0_30 = arith.constant 0 : index
      %c0_31 = arith.constant 0 : index
      %27 = vector.load %arg8[%c0_30, %c0_31] : memref<16x64xbf16, #tpu.memory_space<vmem>>, vector<16x64xbf16>
      tpu.vector_store %arg8[%c0_30, %c0_31], %26 {strides = array<i32>} : memref<16x64xbf16, #tpu.memory_space<vmem>>, vector<16x64xbf16>,
      %c0_32 = arith.constant 0 : index
      %c0_33 = arith.constant 0 : index
      %28 = vector.load %arg12[%c0_32, %c0_33] : memref<16x64xf32, #tpu.memory_space<vmem>>, vector<16x64xf32>
      %29 = arith.truncf %28 : vector<16x64xf32> to vector<16x64xbf16>
      %c0_34 = arith.constant 0 : index
      %c0_35 = arith.constant 0 : index
      %30 = vector.load %arg9[%c0_34, %c0_35] : memref<16x64xbf16, #tpu.memory_space<vmem>>, vector<16x64xbf16>
      tpu.vector_store %arg9[%c0_34, %c0_35], %29 {strides = array<i32>} : memref<16x64xbf16, #tpu.memory_space<vmem>>, vector<16x64xbf16>,
    } else {
    }
    return
  }
  func.func @transform_0(%arg0: i32, %arg1: i32, %arg2: i32) -> (i32, i32) {
    %c0_i32 = arith.constant 0 : i32
    return %arg0, %arg2 : i32, i32
  }
  func.func @transform_1(%arg0: i32, %arg1: i32, %arg2: i32) -> (i32, i32) {
    %c0_i32 = arith.constant 0 : i32
    return %arg2, %arg1 : i32, i32
  }
  func.func @transform_2(%arg0: i32, %arg1: i32, %arg2: i32) -> (i32, i32) {
    %c0_i32 = arith.constant 0 : i32
    return %arg2, %arg1 : i32, i32
  }
  func.func @transform_3(%arg0: i32, %arg1: i32, %arg2: i32) -> (i32, i32) {
    %c0_i32 = arith.constant 0 : i32
    return %arg2, %arg1 : i32, i32
  }
  func.func @transform_4(%arg0: i32, %arg1: i32, %arg2: i32) -> (i32, i32) {
    %c0_i32 = arith.constant 0 : i32
    return %arg0, %arg1 : i32, i32
  }
  func.func @transform_5(%arg0: i32, %arg1: i32, %arg2: i32) -> (i32, i32) {
    %c0_i32 = arith.constant 0 : i32
    return %arg0, %arg1 : i32, i32
  }
  func.func @transform_6(%arg0: i32, %arg1: i32, %arg2: i32) -> (i32, i32) {
    %c0_i32 = arith.constant 0 : i32
    return %arg0, %arg1 : i32, i32
  }
}

</mosaic_0001>

<llo_original>
// kernel: tpu_custom_call.1
$region0: #{tpu_custom_call.1}
  #allocation0 [shape = 'u32[]', space=smem, size = 0x4, offset = 0x4, fixed_abs, tag = 'smem constant byte address 0x4 - core index']
  #allocation1 [shape = 'u32[144,128]{1,0:T(1,128)}', space=vmem, size = 0x12000, scoped, tag = 'internal scratch']
  #allocation2 [shape = 'f32[16,64]{1,0:T(8,128)}', space=vmem, size = 0x2000, scoped, tag = 'scratch operand']
  #allocation3 [shape = 'f32[16,64]{1,0:T(8,128)}', space=vmem, size = 0x2000, scoped, tag = 'scratch operand']
  #allocation4 [shape = 'f32[16,64]{1,0:T(8,128)}', space=vmem, size = 0x2000, scoped, tag = 'scratch operand']
  %s0 = inlined_call_operand.hbm [shape: bf16[16,64], index: 0, kind: input, shape index: {}]
  %s1 = inlined_call_operand.hbm [shape: bf16[64,64], index: 1, kind: input, shape index: {}]
  %s2 = inlined_call_operand.hbm [shape: bf16[64,64], index: 2, kind: input, shape index: {}]
  %s3 = inlined_call_operand.hbm [shape: bf16[64,64], index: 3, kind: input, shape index: {}]
  %s4 = inlined_call_operand.hbm [shape: bf16[16,64], index: 4, kind: output, shape index: {0}]
  %s5 = inlined_call_operand.hbm [shape: bf16[16,64], index: 5, kind: output, shape index: {1}]
  %s6 = inlined_call_operand.hbm [shape: bf16[16,64], index: 6, kind: output, shape index: {2}]
  %7 = xla_tuple %s4, %s5, %s6
  %s8 = sld [smem:[#allocation0]]
  $region66: #{tpu_custom_call.1} parent=0
    _
  %s10 = ssub.s32 1, %s8
  %s11 = scalar_select 0, %s10, %s8
  $region1: #{tpu_custom_call.1} parent=0
    #allocation5 [shape = 'u8[4096]{0}', space=vmem, size = 0x1000, scoped, tag = 'input window, operand 0, single buffered']
    #allocation6 [shape = 's32[1]{0}', space=sflag, size = 0x4, scoped, tag = 'scoped memory for tpu_custom_call.1']
    #allocation7 [shape = 's32[1]{0}', space=sflag, size = 0x4, scoped, tag = 'scoped memory for tpu_custom_call.1']
    #allocation8 [shape = 'u8[16384]{0}', space=vmem, size = 0x4000, scoped, tag = 'input window, operand 1, single buffered']
    #allocation9 [shape = 's32[1]{0}', space=sflag, size = 0x4, scoped, tag = 'scoped memory for tpu_custom_call.1']
    #allocation10 [shape = 'u8[16384]{0}', space=vmem, size = 0x4000, scoped, tag = 'input window, operand 2, single buffered']
    #allocation11 [shape = 'u8[16384]{0}', space=vmem, size = 0x4000, scoped, tag = 'input window, operand 3, single buffered']
    #allocation12 [shape = 's32[1]{0}', space=sflag, size = 0x4, scoped, tag = 'scoped memory for tpu_custom_call.1']
    #allocation13 [shape = 'u8[4096]{0}', space=vmem, size = 0x1000, scoped, tag = 'output window, operand 0, single buffered']
    #allocation14 [shape = 'u8[4096]{0}', space=vmem, size = 0x1000, scoped, tag = 'output window, operand 1, single buffered']
    #allocation15 [shape = 's32[1]{0}', space=sflag, size = 0x4, scoped, tag = 'scoped memory for tpu_custom_call.1']
    #allocation16 [shape = 'u8[4096]{0}', space=vmem, size = 0x1000, scoped, tag = 'output window, operand 2, single buffered']
    %12 = vsyncpa [#allocation6], 0
    %13 = vsyncpa [#allocation9], 0
    %14 = vsyncpa [#allocation12], 0
    %15 = vsyncpa [#allocation7], 0
    %16 = vsyncpa [#allocation15], 0
    // Predicated region
    $region2: #{tpu_custom_call.1} parent=1 // pred_check
      _
    $region3: #{tpu_custom_call.1} parent=1 // pred_check_branch
      %18 = sbr.rel (0) target = $region5
    $region4: #{tpu_custom_call.1} parent=1 // pred_region
      %s20 = ssub.s32 128, 128
      %21 = vsyncadd [#allocation6], %s20
      %s22 = sshll.u32 [#allocation5], 4
      %s23 = int_to_ptr.vmem [resolvable:$true] %s22
      %28 = dma.hbm_to_vmem [thread:$0]  %s0, 128, %s23, [#allocation6], 64, 64, 4
    $region5: #{tpu_custom_call.1} parent=1 // pred_fallthru
      _
    // Predicated region
    $region6: #{tpu_custom_call.1} parent=1 // pred_check
      _
    $region7: #{tpu_custom_call.1} parent=1 // pred_check_branch
      %30 = sbr.rel (0) target = $region9
    $region8: #{tpu_custom_call.1} parent=1 // pred_region
      %s32 = ssub.s32 512, 512
      %33 = vsyncadd [#allocation9], %s32
      %s34 = sshll.u32 [#allocation8], 4
      %s35 = int_to_ptr.vmem [resolvable:$true] %s34
      %40 = dma.hbm_to_vmem [thread:$0]  %s1, 512, %s35, [#allocation9], 64, 64, 4
    $region9: #{tpu_custom_call.1} parent=1 // pred_fallthru
      _
    // Predicated region
    $region10: #{tpu_custom_call.1} parent=1 // pred_check
      _
    $region11: #{tpu_custom_call.1} parent=1 // pred_check_branch
      %42 = sbr.rel (0) target = $region13
    $region12: #{tpu_custom_call.1} parent=1 // pred_region
      %s44 = ssub.s32 512, 512
      %45 = vsyncadd [#allocation9], %s44
      %s46 = sshll.u32 [#allocation10], 4
      %s47 = int_to_ptr.vmem [resolvable:$true] %s46
      %52 = dma.hbm_to_vmem [thread:$0]  %s2, 512, %s47, [#allocation9], 64, 64, 4
    $region13: #{tpu_custom_call.1} parent=1 // pred_fallthru
      _
    // Predicated region
    $region14: #{tpu_custom_call.1} parent=1 // pred_check
      _
    $region15: #{tpu_custom_call.1} parent=1 // pred_check_branch
      %54 = sbr.rel (0) target = $region17
    $region16: #{tpu_custom_call.1} parent=1 // pred_region
      %s56 = ssub.s32 512, 512
      %57 = vsyncadd [#allocation12], %s56
      %s58 = sshll.u32 [#allocation11], 4
      %s59 = int_to_ptr.vmem [resolvable:$true] %s58
      %64 = dma.hbm_to_vmem [thread:$0]  %s3, 512, %s59, [#allocation12], 64, 64, 4
    $region17: #{tpu_custom_call.1} parent=1 // pred_fallthru
      _
    // Predicated region
    $region18: #{tpu_custom_call.1} parent=1 // pred_check
      _
    $region19: #{tpu_custom_call.1} parent=1 // pred_check_branch
      %66 = sbr.rel (0) target = $region21
    $region20: #{tpu_custom_call.1} parent=1 // pred_region
      %67 = dma.done [#allocation6], 128
    $region21: #{tpu_custom_call.1} parent=1 // pred_fallthru
      _
    // Predicated region
    $region22: #{tpu_custom_call.1} parent=1 // pred_check
      _
    $region23: #{tpu_custom_call.1} parent=1 // pred_check_branch
      %69 = sbr.rel (0) target = $region25
    $region24: #{tpu_custom_call.1} parent=1 // pred_region
      %70 = dma.done [#allocation9], 512
    $region25: #{tpu_custom_call.1} parent=1 // pred_fallthru
      _
    // Predicated region
    $region26: #{tpu_custom_call.1} parent=1 // pred_check
      _
    $region27: #{tpu_custom_call.1} parent=1 // pred_check_branch
      %72 = sbr.rel (0) target = $region29
    $region28: #{tpu_custom_call.1} parent=1 // pred_region
      %73 = dma.done [#allocation9], 512
    $region29: #{tpu_custom_call.1} parent=1 // pred_fallthru
      _
    // Predicated region
    $region30: #{tpu_custom_call.1} parent=1 // pred_check
      _
    $region31: #{tpu_custom_call.1} parent=1 // pred_check_branch
      %75 = sbr.rel (0) target = $region33
    $region32: #{tpu_custom_call.1} parent=1 // pred_region
      %76 = dma.done [#allocation12], 512
    $region33: #{tpu_custom_call.1} parent=1 // pred_fallthru
      _
    %p78 = scmp.eq.s32.totalorder 0, 0
    // Predicated region
    $region34: #{tpu_custom_call.1} parent=1 // pred_check
      %p79 = pneg %p78
    $region35: #{tpu_custom_call.1} parent=1 // pred_check_branch
      %81 = sbr.rel (%p79) target = $region37
    $region36: #{tpu_custom_call.1} parent=1 // pred_region
      %vm82 = vcmask 523264
      %83 = vst.msk [vmem:[#allocation2] sm:$0xff] %vm82, 0.0
      %84 = vst.msk [vmem:[#allocation2 + $0x8] sm:$0xff] %vm82, 0.0
      %85 = vst.msk [vmem:[#allocation3] sm:$0xff] %vm82, 0.0
      %86 = vst.msk [vmem:[#allocation3 + $0x8] sm:$0xff] %vm82, 0.0
      %87 = vst.msk [vmem:[#allocation4] sm:$0xff] %vm82, 0.0
      %88 = vst.msk [vmem:[#allocation4 + $0x8] sm:$0xff] %vm82, 0.0
    $region37: #{tpu_custom_call.1} parent=1 // pred_fallthru
      _
    %v89 = vld [vmem:[#allocation5] sm:$0xf]
    %v90 = vld [vmem:[#allocation5 + $0x4] sm:$0xf]
    %v91 = vld [vmem:[#allocation2] sm:$0xff]
    %v92 = vld [vmem:[#allocation2 + $0x8] sm:$0xff]
    %v93 = vld [vmem:[#allocation8] sm:$0xf]
    %v94 = vld [vmem:[#allocation8 + $0x4] sm:$0xf]
    %v95 = vld [vmem:[#allocation8 + $0x8] sm:$0xf]
    %v96 = vld [vmem:[#allocation8 + $0xc] sm:$0xf]
    %v97 = vld [vmem:[#allocation8 + $0x10] sm:$0xf]
    %v98 = vld [vmem:[#allocation8 + $0x14] sm:$0xf]
    %v99 = vld [vmem:[#allocation8 + $0x18] sm:$0xf]
    %v100 = vld [vmem:[#allocation8 + $0x1c] sm:$0xf]
    %v103 = vunpack.c.l.b16 %v89
    %v104 = vunpack.c.l.b16 %v90
    %v105 = vpack.c.b16 %v104, %v103
    %v114 = vunpack.c.l.b16 %v93
    %v115 = vunpack.c.l.b16 %v94
    %v116 = vunpack.c.l.b16 %v95
    %v117 = vunpack.c.l.b16 %v96
    %v118 = vunpack.c.l.b16 %v97
    %v119 = vunpack.c.l.b16 %v98
    %v120 = vunpack.c.l.b16 %v99
    %v121 = vunpack.c.l.b16 %v100
    %v122 = vpack.c.b16 %v115, %v114
    %v123 = vpack.c.b16 %v117, %v116
    %v124 = vpack.c.b16 %v119, %v118
    %v125 = vpack.c.b16 %v121, %v120
    %vm130 = vcmask 523264
    %v132 = vsel %vm130, %v105, 0
    %134 = vmatprep.subr.bf16.mxu0 0
    %135 = vmatpush1.bf16.msra.mxu0 %v122
    %136 = vmatprep.subr.bf16.mxu0 0
    %137 = vmatpush1.bf16.msra.mxu0 %v123
    %138 = vmatprep.subr.bf16.mxu0 0
    %139 = vmatpush1.bf16.msra.mxu0 %v124
    %140 = vmatprep.subr.bf16.mxu0 0
    %141 = vmatpush1.bf16.msra.mxu0 %v125
    %142 = vmatprep.subr.bf16.mxu0 0
    %143 = vmatpush1.bf16.msra.mxu0 0
    %144 = vmatprep.subr.bf16.mxu0 0
    %145 = vmatpush1.bf16.msra.mxu0 0
    %146 = vmatprep.subr.bf16.mxu0 0
    %147 = vmatpush1.bf16.msra.mxu0 0
    %148 = vmatprep.subr.bf16.mxu0 0
    %149 = vmatpush1.bf16.msra.mxu0 0
    %150 = vmatprep.subr.bf16.mxu0 0
    %151 = vmatpush1.bf16.msra.mxu0 0
    %152 = vmatprep.subr.bf16.mxu0 0
    %153 = vmatpush1.bf16.msra.mxu0 0
    %154 = vmatprep.subr.bf16.mxu0 0
    %155 = vmatpush1.bf16.msra.mxu0 0
    %156 = vmatprep.subr.bf16.mxu0 0
    %157 = vmatpush1.bf16.msra.mxu0 0
    %158 = vmatprep.subr.bf16.mxu0 0
    %159 = vmatpush1.bf16.msra.mxu0 0
    %160 = vmatprep.subr.bf16.mxu0 0
    %161 = vmatpush1.bf16.msra.mxu0 0
    %162 = vmatprep.subr.bf16.mxu0 0
    %163 = vmatpush1.bf16.msra.mxu0 0
    %164 = vmatprep.subr.bf16.mxu0 0
    %165 = vmatpush1.bf16.msra.mxu0 0
    %166 = vmatprep.mubr.bf16.mxu0 0
    %167 = vmatmul.mubr.bf16.gmra.mrb[0].mxu0 %v132
    %v168 = vpop.f32.mrb[0].mxu0
    %v169 = vadd.f32 0.0, %v168
    %v170 = vpop.f32.mrb[0].mxu0
    %v171 = vpop.f32.mrb[0].mxu0
    %v172 = vadd.f32 0.0, %v171
    %v173 = vpop.f32.mrb[0].mxu0
    %174 = vdwg.mxu0
    %v175 = vadd.f32 %v91, %v169
    %v176 = vadd.f32 %v92, %v172
    %177 = vst.msk [vmem:[#allocation2] sm:$0xff] %vm130, %v175
    %178 = vst.msk [vmem:[#allocation2 + $0x8] sm:$0xff] %vm130, %v176
    %v179 = vld [vmem:[#allocation3] sm:$0xff]
    %v180 = vld [vmem:[#allocation3 + $0x8] sm:$0xff]
    %v181 = vld [vmem:[#allocation10] sm:$0xf]
    %v182 = vld [vmem:[#allocation10 + $0x4] sm:$0xf]
    %v183 = vld [vmem:[#allocation10 + $0x8] sm:$0xf]
    %v184 = vld [vmem:[#allocation10 + $0xc] sm:$0xf]
    %v185 = vld [vmem:[#allocation10 + $0x10] sm:$0xf]
    %v186 = vld [vmem:[#allocation10 + $0x14] sm:$0xf]
    %v187 = vld [vmem:[#allocation10 + $0x18] sm:$0xf]
    %v188 = vld [vmem:[#allocation10 + $0x1c] sm:$0xf]
    %v197 = vunpack.c.l.b16 %v181
    %v198 = vunpack.c.l.b16 %v182
    %v199 = vunpack.c.l.b16 %v183
    %v200 = vunpack.c.l.b16 %v184
    %v201 = vunpack.c.l.b16 %v185
    %v202 = vunpack.c.l.b16 %v186
    %v203 = vunpack.c.l.b16 %v187
    %v204 = vunpack.c.l.b16 %v188
    %v205 = vpack.c.b16 %v198, %v197
    %v206 = vpack.c.b16 %v200, %v199
    %v207 = vpack.c.b16 %v202, %v201
    %v208 = vpack.c.b16 %v204, %v203
    %213 = vmatprep.subr.bf16.mxu0 0
    %214 = vmatpush1.bf16.msra.mxu0 %v205
    %215 = vmatprep.subr.bf16.mxu0 0
    %216 = vmatpush1.bf16.msra.mxu0 %v206
    %217 = vmatprep.subr.bf16.mxu0 0
    %218 = vmatpush1.bf16.msra.mxu0 %v207
    %219 = vmatprep.subr.bf16.mxu0 0
    %220 = vmatpush1.bf16.msra.mxu0 %v208
    %221 = vmatprep.subr.bf16.mxu0 0
    %222 = vmatpush1.bf16.msra.mxu0 0
    %223 = vmatprep.subr.bf16.mxu0 0
    %224 = vmatpush1.bf16.msra.mxu0 0
    %225 = vmatprep.subr.bf16.mxu0 0
    %226 = vmatpush1.bf16.msra.mxu0 0
    %227 = vmatprep.subr.bf16.mxu0 0
    %228 = vmatpush1.bf16.msra.mxu0 0
    %229 = vmatprep.subr.bf16.mxu0 0
    %230 = vmatpush1.bf16.msra.mxu0 0
    %231 = vmatprep.subr.bf16.mxu0 0
    %232 = vmatpush1.bf16.msra.mxu0 0
    %233 = vmatprep.subr.bf16.mxu0 0
    %234 = vmatpush1.bf16.msra.mxu0 0
    %235 = vmatprep.subr.bf16.mxu0 0
    %236 = vmatpush1.bf16.msra.mxu0 0
    %237 = vmatprep.subr.bf16.mxu0 0
    %238 = vmatpush1.bf16.msra.mxu0 0
    %239 = vmatprep.subr.bf16.mxu0 0
    %240 = vmatpush1.bf16.msra.mxu0 0
    %241 = vmatprep.subr.bf16.mxu0 0
    %242 = vmatpush1.bf16.msra.mxu0 0
    %243 = vmatprep.subr.bf16.mxu0 0
    %244 = vmatpush1.bf16.msra.mxu0 0
    %245 = vmatprep.mubr.bf16.mxu0 0
    %246 = vmatmul.mubr.bf16.gmra.mrb[0].mxu0 %v132
    %v247 = vpop.f32.mrb[0].mxu0
    %v248 = vadd.f32 0.0, %v247
    %v249 = vpop.f32.mrb[0].mxu0
    %v250 = vpop.f32.mrb[0].mxu0
    %v251 = vadd.f32 0.0, %v250
    %v252 = vpop.f32.mrb[0].mxu0
    %253 = vdwg.mxu0
    %v254 = vadd.f32 %v179, %v248
    %v255 = vadd.f32 %v180, %v251
    %256 = vst.msk [vmem:[#allocation3] sm:$0xff] %vm130, %v254
    %257 = vst.msk [vmem:[#allocation3 + $0x8] sm:$0xff] %vm130, %v255
    %v258 = vld [vmem:[#allocation4] sm:$0xff]
    %v259 = vld [vmem:[#allocation4 + $0x8] sm:$0xff]
    %v260 = vld [vmem:[#allocation11] sm:$0xf]
    %v261 = vld [vmem:[#allocation11 + $0x4] sm:$0xf]
    %v262 = vld [vmem:[#allocation11 + $0x8] sm:$0xf]
    %v263 = vld [vmem:[#allocation11 + $0xc] sm:$0xf]
    %v264 = vld [vmem:[#allocation11 + $0x10] sm:$0xf]
    %v265 = vld [vmem:[#allocation11 + $0x14] sm:$0xf]
    %v266 = vld [vmem:[#allocation11 + $0x18] sm:$0xf]
    %v267 = vld [vmem:[#allocation11 + $0x1c] sm:$0xf]
    %v276 = vunpack.c.l.b16 %v260
    %v277 = vunpack.c.l.b16 %v261
    %v278 = vunpack.c.l.b16 %v262
    %v279 = vunpack.c.l.b16 %v263
    %v280 = vunpack.c.l.b16 %v264
    %v281 = vunpack.c.l.b16 %v265
    %v282 = vunpack.c.l.b16 %v266
    %v283 = vunpack.c.l.b16 %v267
    %v284 = vpack.c.b16 %v277, %v276
    %v285 = vpack.c.b16 %v279, %v278
    %v286 = vpack.c.b16 %v281, %v280
    %v287 = vpack.c.b16 %v283, %v282
    %292 = vmatprep.subr.bf16.mxu0 0
    %293 = vmatpush1.bf16.msra.mxu0 %v284
    %294 = vmatprep.subr.bf16.mxu0 0
    %295 = vmatpush1.bf16.msra.mxu0 %v285
    %296 = vmatprep.subr.bf16.mxu0 0
    %297 = vmatpush1.bf16.msra.mxu0 %v286
    %298 = vmatprep.subr.bf16.mxu0 0
    %299 = vmatpush1.bf16.msra.mxu0 %v287
    %300 = vmatprep.subr.bf16.mxu0 0
    %301 = vmatpush1.bf16.msra.mxu0 0
    %302 = vmatprep.subr.bf16.mxu0 0
    %303 = vmatpush1.bf16.msra.mxu0 0
    %304 = vmatprep.subr.bf16.mxu0 0
    %305 = vmatpush1.bf16.msra.mxu0 0
    %306 = vmatprep.subr.bf16.mxu0 0
    %307 = vmatpush1.bf16.msra.mxu0 0
    %308 = vmatprep.subr.bf16.mxu0 0
    %309 = vmatpush1.bf16.msra.mxu0 0
    %310 = vmatprep.subr.bf16.mxu0 0
    %311 = vmatpush1.bf16.msra.mxu0 0
    %312 = vmatprep.subr.bf16.mxu0 0
    %313 = vmatpush1.bf16.msra.mxu0 0
    %314 = vmatprep.subr.bf16.mxu0 0
    %315 = vmatpush1.bf16.msra.mxu0 0
    %316 = vmatprep.subr.bf16.mxu0 0
    %317 = vmatpush1.bf16.msra.mxu0 0
    %318 = vmatprep.subr.bf16.mxu0 0
    %319 = vmatpush1.bf16.msra.mxu0 0
    %320 = vmatprep.subr.bf16.mxu0 0
    %321 = vmatpush1.bf16.msra.mxu0 0
    %322 = vmatprep.subr.bf16.mxu0 0
    %323 = vmatpush1.bf16.msra.mxu0 0
    %324 = vmatprep.mubr.bf16.mxu0 0
    %325 = vmatmul.mubr.bf16.gmra.mrb[0].mxu0 %v132
    %v326 = vpop.f32.mrb[0].mxu0
    %v327 = vadd.f32 0.0, %v326
    %v328 = vpop.f32.mrb[0].mxu0
    %v329 = vpop.f32.mrb[0].mxu0
    %v330 = vadd.f32 0.0, %v329
    %v331 = vpop.f32.mrb[0].mxu0
    %332 = vdwg.mxu0
    %v333 = vadd.f32 %v258, %v327
    %v334 = vadd.f32 %v259, %v330
    %335 = vst.msk [vmem:[#allocation4] sm:$0xff] %vm130, %v333
    %336 = vst.msk [vmem:[#allocation4 + $0x8] sm:$0xff] %vm130, %v334
    // Predicated region
    $region38: #{tpu_custom_call.1} parent=1 // pred_check
      %p337 = pneg %p78
    $region39: #{tpu_custom_call.1} parent=1 // pred_check_branch
      %339 = sbr.rel (%p337) target = $region41
    $region40: #{tpu_custom_call.1} parent=1 // pred_region
      %v340 = vld [vmem:[#allocation2] sm:$0xff]
      %v341 = vld [vmem:[#allocation2 + $0x8] sm:$0xff]
      %v342 = vpack.c.bf16 %v341, %v340
      %v344 = vunpack.c.l.b16 %v342
      %v345 = vunpack.c.h.b16 %v342
      %v346 = vpack.c.b16 %v344, %v344
      %v347 = vpack.c.b16 %v345, %v345
      %vm350 = vcmask 519168
      %351 = vst.msk [vmem:[#allocation13] sm:$0xf] %vm350, %v346
      %352 = vst.msk [vmem:[#allocation13 + $0x4] sm:$0xf] %vm350, %v347
      %v353 = vld [vmem:[#allocation3] sm:$0xff]
      %v354 = vld [vmem:[#allocation3 + $0x8] sm:$0xff]
      %v355 = vpack.c.bf16 %v354, %v353
      %v357 = vunpack.c.l.b16 %v355
      %v358 = vunpack.c.h.b16 %v355
      %v359 = vpack.c.b16 %v357, %v357
      %v360 = vpack.c.b16 %v358, %v358
      %363 = vst.msk [vmem:[#allocation14] sm:$0xf] %vm350, %v359
      %364 = vst.msk [vmem:[#allocation14 + $0x4] sm:$0xf] %vm350, %v360
      %v365 = vld [vmem:[#allocation4] sm:$0xff]
      %v366 = vld [vmem:[#allocation4 + $0x8] sm:$0xff]
      %v367 = vpack.c.bf16 %v366, %v365
      %v369 = vunpack.c.l.b16 %v367
      %v370 = vunpack.c.h.b16 %v367
      %v371 = vpack.c.b16 %v369, %v369
      %v372 = vpack.c.b16 %v370, %v370
      %375 = vst.msk [vmem:[#allocation16] sm:$0xf] %vm350, %v371
      %376 = vst.msk [vmem:[#allocation16 + $0x4] sm:$0xf] %vm350, %v372
    $region41: #{tpu_custom_call.1} parent=1 // pred_fallthru
      _
    // Predicated region
    $region42: #{tpu_custom_call.1} parent=1 // pred_check
      _
    $region43: #{tpu_custom_call.1} parent=1 // pred_check_branch
      %378 = sbr.rel (0) target = $region45
    $region44: #{tpu_custom_call.1} parent=1 // pred_region
      %s380 = ssub.s32 128, 128
      %381 = vsyncadd [#allocation7], %s380
      %s382 = sshll.u32 [#allocation13], 4
      %s383 = int_to_ptr.vmem [resolvable:$true] %s382
      %388 = dma.vmem_to_hbm [thread:$0]  %s383, 128, %s4, [#allocation7], 64, 64, 4
    $region45: #{tpu_custom_call.1} parent=1 // pred_fallthru
      _
    // Predicated region
    $region46: #{tpu_custom_call.1} parent=1 // pred_check
      _
    $region47: #{tpu_custom_call.1} parent=1 // pred_check_branch
      %390 = sbr.rel (0) target = $region49
    $region48: #{tpu_custom_call.1} parent=1 // pred_region
      %s392 = ssub.s32 128, 128
      %393 = vsyncadd [#allocation15], %s392
      %s394 = sshll.u32 [#allocation14], 4
      %s395 = int_to_ptr.vmem [resolvable:$true] %s394
      %400 = dma.vmem_to_hbm [thread:$0]  %s395, 128, %s5, [#allocation15], 64, 64, 4
    $region49: #{tpu_custom_call.1} parent=1 // pred_fallthru
      _
    // Predicated region
    $region50: #{tpu_custom_call.1} parent=1 // pred_check
      _
    $region51: #{tpu_custom_call.1} parent=1 // pred_check_branch
      %402 = sbr.rel (0) target = $region53
    $region52: #{tpu_custom_call.1} parent=1 // pred_region
      %s404 = ssub.s32 128, 128
      %405 = vsyncadd [#allocation15], %s404
      %s406 = sshll.u32 [#allocation16], 4
      %s407 = int_to_ptr.vmem [resolvable:$true] %s406
      %412 = dma.vmem_to_hbm [thread:$0]  %s407, 128, %s6, [#allocation15], 64, 64, 4
    $region53: #{tpu_custom_call.1} parent=1 // pred_fallthru
      _
    // Predicated region
    $region54: #{tpu_custom_call.1} parent=1 // pred_check
      _
    $region55: #{tpu_custom_call.1} parent=1 // pred_check_branch
      %414 = sbr.rel (0) target = $region57
    $region56: #{tpu_custom_call.1} parent=1 // pred_region
      %415 = dma.done [#allocation7], 128
    $region57: #{tpu_custom_call.1} parent=1 // pred_fallthru
      _
    // Predicated region
    $region58: #{tpu_custom_call.1} parent=1 // pred_check
      _
    $region59: #{tpu_custom_call.1} parent=1 // pred_check_branch
      %417 = sbr.rel (0) target = $region61
    $region60: #{tpu_custom_call.1} parent=1 // pred_region
      %418 = dma.done [#allocation15], 128
    $region61: #{tpu_custom_call.1} parent=1 // pred_fallthru
      _
    // Predicated region
    $region62: #{tpu_custom_call.1} parent=1 // pred_check
      _
    $region63: #{tpu_custom_call.1} parent=1 // pred_check_branch
      %420 = sbr.rel (0) target = $region65
    $region64: #{tpu_custom_call.1} parent=1 // pred_region
      %421 = dma.done [#allocation15], 128
    $region65: #{tpu_custom_call.1} parent=1 // pred_fallthru
      _
    %422 = vsyncpa [#allocation6], 1
    %423 = vsyncpa [#allocation9], 1
    %424 = vsyncpa [#allocation12], 1
    %425 = vsyncpa [#allocation7], 1
    %426 = vsyncpa [#allocation15], 1

</llo_original>
